<compile_context>
chip_gen: v7x
topology: tpu7x:2x2x1
jax: 0.10.0
libtpu: 0.0.40
codegen_flags: <defaults>
</compile_context>

<pallas_src>
import functools

import jax
import jax.numpy as jnp
from jax.experimental import pallas as pl
from jax.experimental.pallas import tpu as pltpu


def _round_up(n, m):
    return ((n + m - 1) // m) * m


# ---------------------------------------------------------------------------
# Kernel: one grid step == one Linear layer applied to one batch tile.
# grid = (batch_tiles, num_layers); layer axis innermost ("arbitrary").
# act_ref (VMEM scratch) carries the running activation across layer steps.
# ---------------------------------------------------------------------------
def _layer_step(x_ref, w_ref, b_ref, o_ref, inter_ref, act_ref, *, num_layers):
    l = pl.program_id(1)

    @pl.when(l == 0)
    def _():
        act_ref[...] = x_ref[...]

    # bf16 x bf16 matmul with f32 accumulation on the MXU.
    y = jnp.dot(act_ref[...], w_ref[0], preferred_element_type=jnp.float32)
    y = y + b_ref[0].astype(jnp.float32)
    y_relu = jnp.maximum(y, 0.0)

    @pl.when(l < num_layers - 1)
    def _():
        act_ref[...] = y_relu.astype(act_ref.dtype)

    if inter_ref is not None:
        # Slot for the last layer is never read back (sliced off in wrapper).
        inter_ref[0] = y_relu.astype(inter_ref.dtype)

    @pl.when(l == num_layers - 1)
    def _():
        o_ref[...] = y.astype(o_ref.dtype)


def _kernel_with_inter(x_ref, w_ref, b_ref, o_ref, inter_ref, act_ref, *,
                       num_layers):
    _layer_step(x_ref, w_ref, b_ref, o_ref, inter_ref, act_ref,
                num_layers=num_layers)


def _kernel_no_inter(x_ref, w_ref, b_ref, o_ref, act_ref, *, num_layers):
    _layer_step(x_ref, w_ref, b_ref, o_ref, None, act_ref,
                num_layers=num_layers)


# ---------------------------------------------------------------------------
# VMEM budgeting (generation-aware).
# ---------------------------------------------------------------------------
def _plan_vmem_limit(tm, d_pad, param_dtype, out_dtype, store_intermediates):
    p = jnp.dtype(param_dtype).itemsize
    o = jnp.dtype(out_dtype).itemsize
    est = 0
    est += 2 * tm * d_pad * p                 # input activation block (x2 buf)
    est += 2 * d_pad * d_pad * p              # streamed weight tile (x2 buf)
    est += 2 * d_pad * p                      # streamed bias tile (x2 buf)
    est += 2 * tm * d_pad * o                 # final output block
    if store_intermediates:
        est += 2 * tm * d_pad * p             # intermediate output block
    est += tm * d_pad * p                     # activation scratch
    est += 4 * tm * d_pad * 4                 # f32 temporaries headroom
    try:
        cap = int(pltpu.get_tpu_info().vmem_capacity_bytes)
    except Exception:  # interpret mode / older runtimes
        cap = 64 * 1024 * 1024                # most restrictive current gen (v7x)
    if est > int(0.9 * cap):
        # TODO(synk): add K/N feature tiling of each layer's matmul for widths
        # whose (d_pad x d_pad) weight tile no longer fits a single VMEM block.
        raise ValueError(
            f"per-step VMEM working set ~{est / 2**20:.1f} MiB exceeds ~90% of "
            f"VMEM capacity ({cap / 2**20:.0f} MiB); feature-dim tiling needed")
    return min(int(0.9 * cap), max(2 * est, 32 * 1024 * 1024))


# ---------------------------------------------------------------------------
# Forward builder.
# ---------------------------------------------------------------------------
def _make_forward_fn(dims, m, m_pad, tm, d_pad, param_dtype, out_dtype,
                     store_intermediates, vmem_limit_bytes):
    num_layers = len(dims) - 1
    in_size, out_size = dims[0], dims[-1]
    n_btiles = m_pad // tm

    in_specs = [
        pl.BlockSpec((tm, d_pad), lambda i, l: (i, 0)),           # input act
        pl.BlockSpec((1, d_pad, d_pad), lambda i, l: (l, 0, 0)),  # weights (streamed)
        pl.BlockSpec((1, 1, d_pad), lambda i, l: (l, 0, 0)),      # bias (streamed)
    ]
    out_shape = [jax.ShapeDtypeStruct((m_pad, d_pad), out_dtype)]
    out_specs = [pl.BlockSpec((tm, d_pad), lambda i, l: (i, 0))]
    if store_intermediates:
        kernel = functools.partial(_kernel_with_inter, num_layers=num_layers)
        out_shape.append(
            jax.ShapeDtypeStruct((num_layers, m_pad, d_pad), param_dtype))
        out_specs.append(pl.BlockSpec((1, tm, d_pad), lambda i, l: (l, i, 0)))
    else:
        kernel = functools.partial(_kernel_no_inter, num_layers=num_layers)

    call = pl.pallas_call(
        kernel,
        out_shape=tuple(out_shape),
        grid_spec=pltpu.PrefetchScalarGridSpec(
            num_scalar_prefetch=0,
            grid=(n_btiles, num_layers),
            in_specs=in_specs,
            out_specs=tuple(out_specs),
            scratch_shapes=[pltpu.VMEM((tm, d_pad), param_dtype)],
        ),
        compiler_params=pltpu.CompilerParams(
            dimension_semantics=("parallel", "arbitrary"),
            vmem_limit_bytes=int(vmem_limit_bytes),
        ),
    )

    def fwd(x, w_all, b_all):
        x_pad = jnp.pad(x.astype(param_dtype),
                        ((0, m_pad - m), (0, d_pad - in_size)))
        outs = call(x_pad, w_all, b_all)
        if store_intermediates:
            out_pad, inter_pad = outs
        else:
            out_pad, inter_pad = outs[0], None
        final = out_pad[:m, :out_size]
        return final, inter_pad

    return jax.jit(fwd)


# ---------------------------------------------------------------------------
# Model wrapper (mirrors torch UltraHugeModel semantics).
# ---------------------------------------------------------------------------
class UltraHugeModelPallas:

    def __init__(self, input_size=512, hidden_size=2048, output_size=512,
                 num_layers=200, key=jax.random.PRNGKey(0),
                 param_dtype=jnp.bfloat16, out_dtype=jnp.float32):
        assert num_layers >= 2
        self.num_layers = num_layers
        self.param_dtype = param_dtype
        self.out_dtype = out_dtype
        self.dims = [input_size] + [hidden_size] * (num_layers - 1) + [output_size]

        # Lane padding: 256-multiples once real widths hit the 256x256 MXU.
        lane_mult = 256 if max(self.dims) >= 256 else 128
        self.d_pad = _round_up(max(self.dims), lane_mult)
        # TODO(synk): per-layer (ragged) padding of fan_in/fan_out would shrink
        # only the first/last layer tiles here (~1% of weight bytes for this
        # architecture), so a single D_pad with an offset table was not added.

        # Sublane multiple (bf16 packs 16 rows / sublane-pair).
        self._sub_mult = 16 if jnp.dtype(param_dtype).itemsize == 2 else 8

        # ---- parameters (torch.nn.Linear init scheme), master copy in f32.
        self.params = []  # list of (W [in,out] f32, b [out] f32)
        keys = jax.random.split(key, num_layers * 2)
        for li in range(num_layers):
            fan_in, fan_out = self.dims[li], self.dims[li + 1]
            bound = float(fan_in) ** -0.5
            w = jax.random.uniform(keys[2 * li], (fan_in, fan_out),
                                   minval=-bound, maxval=bound,
                                   dtype=jnp.float32)
            b = jax.random.uniform(keys[2 * li + 1], (fan_out,),
                                   minval=-bound, maxval=bound,
                                   dtype=jnp.float32)
            self.params.append((w, b))

        # ---- packed, zero-padded, bf16 parameters (done once, off hot path).
        w_all = jnp.zeros((num_layers, self.d_pad, self.d_pad), param_dtype)
        b_all = jnp.zeros((num_layers, 1, self.d_pad), param_dtype)
        for li, (w, b) in enumerate(self.params):
            fan_in, fan_out = self.dims[li], self.dims[li + 1]
            w_all = w_all.at[li, :fan_in, :fan_out].set(w.astype(param_dtype))
            b_all = b_all.at[li, 0, :fan_out].set(b.astype(param_dtype))
        self.w_all = w_all
        self.b_all = b_all

        self._fwd_cache = {}
        self._input = None
        self._inter_pad = None
        self._m = None

    def _get_fwd(self, m, store_intermediates):
        key = (m, store_intermediates)
        fn = self._fwd_cache.get(key)
        if fn is None:
            tm = _round_up(m, self._sub_mult)
            if tm > 256:
                tm = 256
            m_pad = _round_up(m, tm)
            vmem_limit = _plan_vmem_limit(tm, self.d_pad, self.param_dtype,
                                          self.out_dtype, store_intermediates)
            fn = _make_forward_fn(self.dims, m, m_pad, tm, self.d_pad,
                                  self.param_dtype, self.out_dtype,
                                  store_intermediates, vmem_limit)
            self._fwd_cache[key] = fn
        return fn

    def forward(self, x, store_intermediates=True):
        m = int(x.shape[0])
        final, inter_pad = self._get_fwd(m, store_intermediates)(
            x, self.w_all, self.b_all)
        self._input = x
        self._inter_pad = inter_pad
        self._m = m
        return final

    @property
    def intermediate_outputs(self):
        if self._input is None:
            return []
        n = 1 + (self.num_layers - 1 if self._inter_pad is not None else 0)
        return [self.backtrack(i) for i in range(n)]

    def backtrack(self, layer_index):
        n_avail = 0
        if self._input is not None:
            n_avail = 1 + (self.num_layers - 1
                           if self._inter_pad is not None else 0)
        if 0 <= layer_index < n_avail:
            if layer_index == 0:
                return self._input
            # Lazy slice of the padded intermediate stack (no per-forward copies).
            return self._inter_pad[layer_index - 1, :self._m,
                                   :self.dims[layer_index]].astype(self.out_dtype)
        raise IndexError(f"Layer index {layer_index} out of range.")


# ---------------------------------------------------------------------------
# Pure-JAX reference matching the kernel's numerics (bf16 params/acts, f32 acc).
# ---------------------------------------------------------------------------
def _reference_forward(x, params, param_dtype):
    act = x.astype(param_dtype)
    n = len(params)
    y = None
    for i, (w, b) in enumerate(params):
        y = jnp.dot(act, w.astype(param_dtype),
                    preferred_element_type=jnp.float32)
        y = y + b.astype(jnp.float32)
        if i < n - 1:
            act = jnp.maximum(y, 0.0).astype(param_dtype)
    return y


if __name__ == "__main__":
    # Small shapes consistent with the module's structure.
    batch, input_size, hidden_size, output_size, num_layers = 8, 32, 64, 32, 6

    model = UltraHugeModelPallas(
        input_size=input_size,
        hidden_size=hidden_size,
        output_size=output_size,
        num_layers=num_layers,
        key=jax.random.PRNGKey(0),
    )

    x = jax.random.normal(jax.random.PRNGKey(42), (batch, input_size),
                          dtype=jnp.float32)

    # Default path: matches torch semantics (intermediates recorded).
    out = jax.block_until_ready(model.forward(x))
    assert out.shape == (batch, output_size)
    assert out.dtype == jnp.float32

    ref = _reference_forward(x, model.params, model.param_dtype)
    assert jnp.allclose(out, ref, atol=2e-2, rtol=2e-2), (
        float(jnp.max(jnp.abs(out - ref))))

    # backtrack() sanity checks.
    assert model.backtrack(0).shape == (batch, input_size)
    h1 = model.backtrack(1)
    assert h1.shape == (batch, hidden_size)
    ref_h1 = jnp.maximum(
        jnp.dot(x.astype(model.param_dtype),
                model.params[0][0].astype(model.param_dtype),
                preferred_element_type=jnp.float32)
        + model.params[0][1].astype(jnp.float32), 0.0)
    assert jnp.allclose(h1, ref_h1, atol=2e-2, rtol=2e-2)

    # Fast path: no intermediate-activation writeback at all.
    out_fast = jax.block_until_ready(
        model.forward(x, store_intermediates=False))
    assert jnp.allclose(out_fast, out, atol=1e-3, rtol=1e-3)

    print("KERNEL_OK")
</pallas_src>

<mosaic_0001>
module attributes {stable_mosaic.version = 11 : i64} {
  func.func @_kernel_with_inter(%arg0: i32, %arg1: i32, %arg2: memref<16x128xbf16, #tpu.memory_space<vmem>>, %arg3: memref<1x128x128xbf16, #tpu.memory_space<vmem>>, %arg4: memref<1x1x128xbf16, #tpu.memory_space<vmem>>, %arg5: memref<16x128xf32, #tpu.memory_space<vmem>>, %arg6: memref<1x16x128xbf16, #tpu.memory_space<vmem>>, %arg7: memref<16x128xbf16, #tpu.memory_space<vmem>>) attributes {dimension_semantics = [#tpu.dimension_semantics<parallel>, #tpu.dimension_semantics<arbitrary>], iteration_bounds = array<i64: 1, 6>, scalar_prefetch = 0 : i64, scratch_operands = 1 : i64, tpu.core_type = #tpu.core_type<tc>, window_params = [{transform_indices = @transform_0, window_bounds = array<i64: 16, 128>}, {transform_indices = @transform_1, window_bounds = array<i64: 1, 128, 128>}, {transform_indices = @transform_2, window_bounds = array<i64: 1, 1, 128>}, {transform_indices = @transform_3, window_bounds = array<i64: 16, 128>}, {transform_indices = @transform_4, window_bounds = array<i64: 1, 16, 128>}]} {
    %c0_i32 = arith.constant 0 : i32
    %0 = arith.cmpi eq, %arg1, %c0_i32 : i32
    %1 = arith.extui %0 : i1 to i32
    %c0_i32_0 = arith.constant 0 : i32
    %2 = arith.cmpi ne, %1, %c0_i32_0 : i32
    scf.if %2 {
      %c0_15 = arith.constant 0 : index
      %c0_16 = arith.constant 0 : index
      %24 = vector.load %arg2[%c0_15, %c0_16] : memref<16x128xbf16, #tpu.memory_space<vmem>>, vector<16x128xbf16>
      %c0_17 = arith.constant 0 : index
      %c0_18 = arith.constant 0 : index
      %25 = vector.load %arg7[%c0_17, %c0_18] : memref<16x128xbf16, #tpu.memory_space<vmem>>, vector<16x128xbf16>
      tpu.vector_store %arg7[%c0_17, %c0_18], %24 {strides = array<i32>} : memref<16x128xbf16, #tpu.memory_space<vmem>>, vector<16x128xbf16>,
    } else {
    }
    %c0 = arith.constant 0 : index
    %c0_1 = arith.constant 0 : index
    %3 = vector.load %arg7[%c0, %c0_1] : memref<16x128xbf16, #tpu.memory_space<vmem>>, vector<16x128xbf16>
    %c0_2 = arith.constant 0 : index
    %c0_3 = arith.constant 0 : index
    %c0_4 = arith.constant 0 : index
    %4 = vector.load %arg3[%c0_2, %c0_3, %c0_4] : memref<1x128x128xbf16, #tpu.memory_space<vmem>>, vector<1x128x128xbf16>
    %5 = vector.shape_cast %4 : vector<1x128x128xbf16> to vector<128x128xbf16>
    %cst = arith.constant dense<0.000000e+00> : vector<16x128xf32>
    %6 = tpu.matmul %3, %5, %cst {dimension_numbers = #tpu.dot_dimension_numbers<[1], [0], [0], [1], [0, 0, 1, 1], [], []>} : vector<16x128xbf16>, vector<128x128xbf16>, vector<16x128xf32> -> vector<16x128xf32>
    %c0_5 = arith.constant 0 : index
    %c0_6 = arith.constant 0 : index
    %c0_7 = arith.constant 0 : index
    %7 = vector.load %arg4[%c0_5, %c0_6, %c0_7] : memref<1x1x128xbf16, #tpu.memory_space<vmem>>, vector<1x1x128xbf16>
    %8 = vector.shape_cast %7 : vector<1x1x128xbf16> to vector<1x128xbf16>
    %9 = arith.extf %8 : vector<1x128xbf16> to vector<1x128xf32>
    %10 = vector.broadcast %9 : vector<1x128xf32> to vector<16x128xf32>
    %11 = arith.addf %6, %10 : vector<16x128xf32>
    %cst_8 = arith.constant 0.000000e+00 : f32
    %12 = vector.broadcast %cst_8 : f32 to vector<16x128xf32>
    %13 = arith.maximumf %11, %12 : vector<16x128xf32>
    %c5_i32 = arith.constant 5 : i32
    %14 = arith.cmpi slt, %arg1, %c5_i32 : i32
    %15 = arith.extui %14 : i1 to i32
    %c0_i32_9 = arith.constant 0 : i32
    %16 = arith.cmpi ne, %15, %c0_i32_9 : i32
    scf.if %16 {
      %24 = arith.truncf %13 : vector<16x128xf32> to vector<16x128xbf16>
      %c0_15 = arith.constant 0 : index
      %c0_16 = arith.constant 0 : index
      %25 = vector.load %arg7[%c0_15, %c0_16] : memref<16x128xbf16, #tpu.memory_space<vmem>>, vector<16x128xbf16>
      tpu.vector_store %arg7[%c0_15, %c0_16], %24 {strides = array<i32>} : memref<16x128xbf16, #tpu.memory_space<vmem>>, vector<16x128xbf16>,
    } else {
    }
    %17 = arith.truncf %13 : vector<16x128xf32> to vector<16x128xbf16>
    %c0_10 = arith.constant 0 : index
    %c0_11 = arith.constant 0 : index
    %c0_12 = arith.constant 0 : index
    %18 = vector.load %arg6[%c0_10, %c0_11, %c0_12] : memref<1x16x128xbf16, #tpu.memory_space<vmem>>, vector<1x16x128xbf16>
    %19 = vector.shape_cast %18 : vector<1x16x128xbf16> to vector<16x128xbf16>
    %20 = vector.shape_cast %17 : vector<16x128xbf16> to vector<1x16x128xbf16>
    tpu.vector_store %arg6[%c0_10, %c0_11, %c0_12], %20 {strides = array<i32>} : memref<1x16x128xbf16, #tpu.memory_space<vmem>>, vector<1x16x128xbf16>,
    %c5_i32_13 = arith.constant 5 : i32
    %21 = arith.cmpi eq, %arg1, %c5_i32_13 : i32
    %22 = arith.extui %21 : i1 to i32
    %c0_i32_14 = arith.constant 0 : i32
    %23 = arith.cmpi ne, %22, %c0_i32_14 : i32
    scf.if %23 {
      %c0_15 = arith.constant 0 : index
      %c0_16 = arith.constant 0 : index
      %24 = vector.load %arg5[%c0_15, %c0_16] : memref<16x128xf32, #tpu.memory_space<vmem>>, vector<16x128xf32>
      tpu.vector_store %arg5[%c0_15, %c0_16], %11 {strides = array<i32>} : memref<16x128xf32, #tpu.memory_space<vmem>>, vector<16x128xf32>,
    } else {
    }
    return
  }
  func.func @transform_0(%arg0: i32, %arg1: i32) -> (i32, i32) {
    %c0_i32 = arith.constant 0 : i32
    %c0_i32_0 = arith.constant 0 : i32
    return %arg0, %c0_i32 : i32, i32
  }
  func.func @transform_1(%arg0: i32, %arg1: i32) -> (i32, i32, i32) {
    %c0_i32 = arith.constant 0 : i32
    %c0_i32_0 = arith.constant 0 : i32
    %c0_i32_1 = arith.constant 0 : i32
    return %arg1, %c0_i32, %c0_i32_0 : i32, i32, i32
  }
  func.func @transform_2(%arg0: i32, %arg1: i32) -> (i32, i32, i32) {
    %c0_i32 = arith.constant 0 : i32
    %c0_i32_0 = arith.constant 0 : i32
    %c0_i32_1 = arith.constant 0 : i32
    return %arg1, %c0_i32, %c0_i32_0 : i32, i32, i32
  }
  func.func @transform_3(%arg0: i32, %arg1: i32) -> (i32, i32) {
    %c0_i32 = arith.constant 0 : i32
    %c0_i32_0 = arith.constant 0 : i32
    return %arg0, %c0_i32 : i32, i32
  }
  func.func @transform_4(%arg0: i32, %arg1: i32) -> (i32, i32, i32) {
    %c0_i32 = arith.constant 0 : i32
    %c0_i32_0 = arith.constant 0 : i32
    return %arg1, %arg0, %c0_i32 : i32, i32, i32
  }
}

</mosaic_0001>

<llo_original>
// kernel: fwd.1
$region0: #{fwd.1}
  #allocation0 [shape = 'u32[]', space=smem, size = 0x4, offset = 0x4, fixed_abs, tag = 'smem constant byte address 0x4 - core index']
  #allocation1 [shape = 'u32[144,128]{1,0:T(1,128)}', space=vmem, size = 0x12000, scoped, tag = 'internal scratch']
  #allocation2 [shape = 'bf16[16,128]{1,0:T(16,128)(2,1)}', space=vmem, size = 0x1000, scoped, tag = 'scratch operand']
  %s0 = inlined_call_operand.vmem [shape: bf16[16,128], index: 0, kind: input, shape index: {}]
  %s1 = inlined_call_operand.hbm [shape: bf16[6,128,128], index: 1, kind: input, shape index: {}]
  %s2 = inlined_call_operand.vmem [shape: bf16[6,1,128], index: 2, kind: input, shape index: {}]
  %s3 = inlined_call_operand.vmem [shape: f32[16,128], index: 3, kind: output, shape index: {0}]
  %s4 = inlined_call_operand.hbm [shape: bf16[6,16,128], index: 4, kind: output, shape index: {1}]
  %5 = xla_tuple %s3, %s4
  %s6 = sld [smem:[#allocation0]]
  $region69: #{fwd.1} parent=0
    _
  %s8 = ssub.s32 1, %s6
  %s9 = scalar_select 0, %s8, %s6
  $region1: #{fwd.1} parent=0
    #allocation3 [shape = 'u8[65536]{0}', space=vmem, size = 0x10000, scoped, tag = 'input window, operand 1']
    #allocation4 [shape = 's32[2]{0}', space=sflag, size = 0x8, scoped, tag = 'scoped memory for fwd.1']
    #allocation5 [shape = 's32[2]{0}', space=sflag, size = 0x8, scoped, tag = 'scoped memory for fwd.1']
    #allocation6 [shape = 'u8[8192]{0}', space=vmem, size = 0x2000, scoped, tag = 'output window, operand 1']
    %10 = vsyncpa [#allocation4], 0
    %s11 = scalar_lea.sflag [#allocation4], 1
    %12 = vsyncpa %s11, 0
    %13 = vsyncpa [#allocation5], 0
    %s14 = scalar_lea.sflag [#allocation5], 1
    %15 = vsyncpa %s14, 0
    loop: start=0, step=1, limit=8
    $region2: #{fwd.1} parent=1 // loop_pre_header
      _
    $region3: #{fwd.1} parent=1 // loop_header
      %s17 = sphi 0, %s21
      %p18 = scmp.ge.s32.totalorder %s17, 8
      %s24 = sphi 0, %s36
      %s25 = sphi 0, %s32
      %s26 = sphi 0, %s24
      %s27 = sphi 0, %s25
      %s28 = sphi 0, %s26
      %s29 = sphi 0, %s27
      %s39 = sphi 0, %s41
      %s42 = sphi 0, %s39
      %s43 = sphi 0, %s42
      %s59 = sphi 0, %s43
      %s65 = sphi 0, %s67
      %s68 = sphi 0, %s65
      %s69 = sphi 0, %s68
      %s85 = sphi 0, %s69
      %s91 = sphi 0, %s93
      %s94 = sphi 0, %s91
      %s95 = sphi 0, %s94
      %s111 = sphi 0, %s95
      %s117 = sphi 0, %s119
      %s120 = sphi 0, %s117
      %s121 = sphi 0, %s120
      %s137 = sphi 0, %s121
      %s145 = sphi 0, %s147
      %s148 = sphi 0, %s145
      %s149 = sphi 0, %s148
      %s165 = sphi 0, %s149
    $region4: #{fwd.1} parent=1 // loop_header_branch
      %20 = sbr.rel (%p18) target = $region8
    $region5: #{fwd.1} parent=1 // loop_body
      %s22 = ssub.s32 %s17, 1
      %s23 = ssub.s32 %s17, 2
      %s30 = sadd.s32 1, %s25
      %p31 = scmp.ge.s32.totalorder %s30, 6
      %s32 = scalar_select %p31, 0, %s30
      %s33 = sadd.s32 1, %s24
      %s34 = scalar_select %p31, %s33, %s24
      %p35 = scmp.ge.s32.totalorder %s34, 1
      %s36 = scalar_select %p35, 0, %s34
      %s37 = ssub.s32 %s24, %s36
      %p38 = scmp.eq.s32.totalorder %s37, 0
      %s40 = sadd.s32 %s39, 1
      %s41 = scalar_select %p38, %s39, %s40
      %p44 = pneg %p38
      %p45 = scmp.eq.s32.totalorder %s17, 5
      %p46 = por %p44, %p45
      %p47 = scmp.ne.s32.totalorder %s39, %s42
      %p48 = scmp.eq.s32.totalorder %s17, 0
      %p49 = por %p47, %p48
      %p50 = scmp.ne.s32.totalorder %s39, %s42
      %p51 = scmp.eq.s32.totalorder %s22, 5
      %p52 = por %p50, %p51
      %p53 = scmp.ne.s32.totalorder %s42, %s43
      %p54 = scmp.eq.s32.totalorder %s22, 0
      %p55 = por %p53, %p54
      %p56 = scmp.ne.s32.totalorder %s42, %s43
      %p57 = scmp.eq.s32.totalorder %s23, 5
      %p58 = por %p56, %p57
      %p60 = scmp.ne.s32.totalorder %s43, %s59
      %p61 = scmp.eq.s32.totalorder %s23, 0
      %p62 = por %p60, %p61
      %s63 = ssub.s32 %s25, %s32
      %p64 = scmp.eq.s32.totalorder %s63, 0
      %s66 = sadd.s32 %s65, 1
      %s67 = scalar_select %p64, %s65, %s66
      %p70 = pneg %p64
      %p71 = scmp.eq.s32.totalorder %s17, 5
      %p72 = por %p70, %p71
      %p73 = scmp.ne.s32.totalorder %s65, %s68
      %p74 = scmp.eq.s32.totalorder %s17, 0
      %p75 = por %p73, %p74
      %p76 = scmp.ne.s32.totalorder %s65, %s68
      %p77 = scmp.eq.s32.totalorder %s22, 5
      %p78 = por %p76, %p77
      %p79 = scmp.ne.s32.totalorder %s68, %s69
      %p80 = scmp.eq.s32.totalorder %s22, 0
      %p81 = por %p79, %p80
      %p82 = scmp.ne.s32.totalorder %s68, %s69
      %p83 = scmp.eq.s32.totalorder %s23, 5
      %p84 = por %p82, %p83
      %p86 = scmp.ne.s32.totalorder %s69, %s85
      %p87 = scmp.eq.s32.totalorder %s23, 0
      %p88 = por %p86, %p87
      %s89 = ssub.s32 %s25, %s32
      %p90 = scmp.eq.s32.totalorder %s89, 0
      %s92 = sadd.s32 %s91, 1
      %s93 = scalar_select %p90, %s91, %s92
      %p96 = pneg %p90
      %p97 = scmp.eq.s32.totalorder %s17, 5
      %p98 = por %p96, %p97
      %p99 = scmp.ne.s32.totalorder %s91, %s94
      %p100 = scmp.eq.s32.totalorder %s17, 0
      %p101 = por %p99, %p100
      %p102 = scmp.ne.s32.totalorder %s91, %s94
      %p103 = scmp.eq.s32.totalorder %s22, 5
      %p104 = por %p102, %p103
      %p105 = scmp.ne.s32.totalorder %s94, %s95
      %p106 = scmp.eq.s32.totalorder %s22, 0
      %p107 = por %p105, %p106
      %p108 = scmp.ne.s32.totalorder %s94, %s95
      %p109 = scmp.eq.s32.totalorder %s23, 5
      %p110 = por %p108, %p109
      %p112 = scmp.ne.s32.totalorder %s95, %s111
      %p113 = scmp.eq.s32.totalorder %s23, 0
      %p114 = por %p112, %p113
      %s115 = ssub.s32 %s24, %s36
      %p116 = scmp.eq.s32.totalorder %s115, 0
      %s118 = sadd.s32 %s117, 1
      %s119 = scalar_select %p116, %s117, %s118
      %p122 = pneg %p116
      %p123 = scmp.eq.s32.totalorder %s17, 5
      %p124 = por %p122, %p123
      %p125 = scmp.ne.s32.totalorder %s117, %s120
      %p126 = scmp.eq.s32.totalorder %s17, 0
      %p127 = por %p125, %p126
      %p128 = scmp.ne.s32.totalorder %s117, %s120
      %p129 = scmp.eq.s32.totalorder %s22, 5
      %p130 = por %p128, %p129
      %p131 = scmp.ne.s32.totalorder %s120, %s121
      %p132 = scmp.eq.s32.totalorder %s22, 0
      %p133 = por %p131, %p132
      %p134 = scmp.ne.s32.totalorder %s120, %s121
      %p135 = scmp.eq.s32.totalorder %s23, 5
      %p136 = por %p134, %p135
      %p138 = scmp.ne.s32.totalorder %s121, %s137
      %p139 = scmp.eq.s32.totalorder %s23, 0
      %p140 = por %p138, %p139
      %s141 = ssub.s32 %s25, %s32
      %s142 = ssub.s32 %s24, %s36
      %s143 = sor.u32 %s141, %s142
      %p144 = scmp.eq.s32.totalorder %s143, 0
      %s146 = sadd.s32 %s145, 1
      %s147 = scalar_select %p144, %s145, %s146
      %p150 = pneg %p144
      %p151 = scmp.eq.s32.totalorder %s17, 5
      %p152 = por %p150, %p151
      %p153 = scmp.ne.s32.totalorder %s145, %s148
      %p154 = scmp.eq.s32.totalorder %s17, 0
      %p155 = por %p153, %p154
      %p156 = scmp.ne.s32.totalorder %s145, %s148
      %p157 = scmp.eq.s32.totalorder %s22, 5
      %p158 = por %p156, %p157
      %p159 = scmp.ne.s32.totalorder %s148, %s149
      %p160 = scmp.eq.s32.totalorder %s22, 0
      %p161 = por %p159, %p160
      %p162 = scmp.ne.s32.totalorder %s148, %s149
      %p163 = scmp.eq.s32.totalorder %s23, 5
      %p164 = por %p162, %p163
      %p166 = scmp.ne.s32.totalorder %s149, %s165
      %p167 = scmp.eq.s32.totalorder %s23, 0
      %p168 = por %p166, %p167
      %p169 = scmp.le.s32.totalorder 1, %s17
      %p170 = scmp.lt.s32.totalorder %s17, 7
      %p171 = pnand %p169, %p170
      %p172 = pneg %p171
      // Predicated region
      $region9: #{fwd.1} parent=5 // pred_check
        _
      $region10: #{fwd.1} parent=5 // pred_check_branch
        %174 = sbr.rel (%p171) target = $region12
      $region11: #{fwd.1} parent=5 // pred_region
        %s175 = ssub.s32 %s17, 1
        // Predicated region
        $region13: #{fwd.1} parent=11 // pred_check
          %p176 = pneg %p55
        $region14: #{fwd.1} parent=11 // pred_check_branch
          %178 = sbr.rel (%p176) target = $region16
        $region15: #{fwd.1} parent=11 // pred_region
          %s179 = smul.u32 2, %s26
          %p180 = scmp.lt.s32.totalorder %s179, 1
          %s181 = scalar_select %p180, %s179, 1
          %s182 = smul.addr %s181, 4
          %s183 = scalar_lea.vmem %s0, %s182
          %s184 = smul.u32 2, %s26
        $region16: #{fwd.1} parent=11 // pred_fallthru
          _
      $region12: #{fwd.1} parent=5 // pred_fallthru
        _
      %p185 = scmp.lt.s32.totalorder %s17, 6
      // Predicated region
      $region17: #{fwd.1} parent=5 // pred_check
        %p186 = pneg %p185
      $region18: #{fwd.1} parent=5 // pred_check_branch
        %188 = sbr.rel (%p186) target = $region20
      $region19: #{fwd.1} parent=5 // pred_region
        // Predicated region
        $region21: #{fwd.1} parent=19 // pred_check
          %p189 = pneg %p75
        $region22: #{fwd.1} parent=19 // pred_check_branch
          %191 = sbr.rel (%p189) target = $region24
        $region23: #{fwd.1} parent=19 // pred_region
          %s192 = sand.u32 %s65, 1
          %s193 = scalar_lea.sflag [#allocation4], %s192
          %s194 = sand.u32 %s65, 1
          %s195 = smul.addr %s194, 64
          %s196 = scalar_lea.vmem [#allocation3], %s195
          %s198 = ssub.s32 1024, 1024
          %199 = vsyncadd %s193, %s198
          %s200 = smul.addr %s25, 16
          %s201 = smul.addr %s200, 64
          %s202 = scalar_lea.hbm %s1, %s201
          %s203 = sshll.u32 %s196, 4
          %s204 = int_to_ptr.vmem [resolvable:$true] %s203
          %209 = dma.hbm_to_vmem [thread:$0]  %s202, 1024, %s204, %s193, 64, 64, 4
        $region24: #{fwd.1} parent=19 // pred_fallthru
          _
        // Predicated region
        $region25: #{fwd.1} parent=19 // pred_check
          %p210 = pneg %p101
        $region26: #{fwd.1} parent=19 // pred_check_branch
          %212 = sbr.rel (%p210) target = $region28
        $region27: #{fwd.1} parent=19 // pred_region
          %p213 = scmp.lt.s32.totalorder %s25, 5
          %s214 = scalar_select %p213, %s25, 5
          %s215 = scalar_lea.vmem %s2, %s214
        $region28: #{fwd.1} parent=19 // pred_fallthru
          _
      $region20: #{fwd.1} parent=5 // pred_fallthru
        _
      %p216 = scmp.le.s32.totalorder 1, %s17
      %p217 = scmp.lt.s32.totalorder %s17, 7
      %p218 = pnand %p216, %p217
      %p219 = pneg %p218
      // Predicated region
      $region29: #{fwd.1} parent=5 // pred_check
        _
      $region30: #{fwd.1} parent=5 // pred_check_branch
        %221 = sbr.rel (%p218) target = $region32
      $region31: #{fwd.1} parent=5 // pred_region
        %s222 = ssub.s32 %s17, 1
        %s223 = sand.u32 %s68, 1
        %s224 = scalar_lea.sflag [#allocation4], %s223
        %s225 = sand.u32 %s68, 1
        %s226 = smul.addr %s225, 64
        %s227 = scalar_lea.vmem [#allocation3], %s226
        // Predicated region
        $region33: #{fwd.1} parent=31 // pred_check
          %p228 = pneg %p81
        $region34: #{fwd.1} parent=31 // pred_check_branch
          %230 = sbr.rel (%p228) target = $region36
        $region35: #{fwd.1} parent=31 // pred_region
          %231 = dma.done %s224, 1024
        $region36: #{fwd.1} parent=31 // pred_fallthru
          _
        %s232 = smul.u32 2, %s26
        %p233 = scmp.lt.s32.totalorder %s232, 1
        %s234 = scalar_select %p233, %s232, 1
        %s235 = smul.addr %s234, 4
        %s236 = scalar_lea.vmem %s0, %s235
        %p237 = pneg %p55
        %p238 = pneg %p52
        %s239 = sand.u32 %s68, 1
        %s240 = scalar_lea.sflag [#allocation4], %s239
        %s241 = sand.u32 %s68, 1
        %s242 = smul.addr %s241, 64
        %s243 = scalar_lea.vmem [#allocation3], %s242
        %p244 = pneg %p81
        %p245 = pneg %p78
        %p246 = scmp.lt.s32.totalorder %s27, 5
        %s247 = scalar_select %p246, %s27, 5
        %s248 = scalar_lea.vmem %s2, %s247
        %p249 = pneg %p107
        %p250 = pneg %p104
        %p251 = pneg %p133
        %p252 = pneg %p130
        %s253 = smul.u32 2, %s26
        %p254 = scmp.lt.s32.totalorder %s253, 1
        %s255 = scalar_select %p254, %s253, 1
        %s256 = smul.addr %s255, 8
        %s257 = scalar_lea.vmem %s3, %s256
        %p258 = pneg %p161
        %p259 = pneg %p158
        %s260 = sand.u32 %s148, 1
        %s261 = scalar_lea.sflag [#allocation5], %s260
        %s262 = sand.u32 %s148, 1
        %s263 = smul.addr %s262, 8
        %s264 = scalar_lea.vmem [#allocation6], %s263
        %s265 = smul.u32 2, %s26
        %p266 = scmp.lt.s32.totalorder %s265, 1
        %s267 = scalar_select %p266, %s265, 1
        %s268 = smul.addr %s267, 4
        %s269 = scalar_lea.vmem %s0, %s268
        %s270 = smul.u32 2, %s26
        %p271 = scmp.lt.s32.totalorder %s27, 5
        %s272 = scalar_select %p271, %s27, 5
        %s273 = scalar_lea.vmem %s2, %s272
        %s274 = smul.u32 2, %s26
        %p275 = scmp.lt.s32.totalorder %s274, 1
        %s276 = scalar_select %p275, %s274, 1
        %s277 = smul.addr %s276, 8
        %s278 = scalar_lea.vmem %s3, %s277
        %s279 = smul.u32 2, %s26
        %s280 = smul.u32 2, %s26
        %p282 = scmp.eq.s32.totalorder %s27, 0
        // Predicated region
        $region37: #{fwd.1} parent=31 // pred_check
          %p283 = pneg %p282
        $region38: #{fwd.1} parent=31 // pred_check_branch
          %285 = sbr.rel (%p283) target = $region40
        $region39: #{fwd.1} parent=31 // pred_region
          %v286 = vld [vmem:[%s269] sm:$0xf]
          %v287 = vld [vmem:[%s269 + $0x4] sm:$0xf]
          %v290 = vunpack.c.l.b16 %v286
          %v291 = vunpack.c.l.b16 %v287
          %v292 = vpack.c.b16 %v291, %v290
          %294 = vst [vmem:[#allocation2] sm:$0xff] %v292
        $region40: #{fwd.1} parent=31 // pred_fallthru
          _
        %v295 = vld [vmem:[#allocation2] sm:$0xff]
        %v296 = vld [vmem:[%s227] sm:$0xf]
        %v297 = vld [vmem:[%s227 + $0x4] sm:$0xf]
        %v298 = vld [vmem:[%s227 + $0x8] sm:$0xf]
        %v299 = vld [vmem:[%s227 + $0xc] sm:$0xf]
        %v300 = vld [vmem:[%s227 + $0x10] sm:$0xf]
        %v301 = vld [vmem:[%s227 + $0x14] sm:$0xf]
        %v302 = vld [vmem:[%s227 + $0x18] sm:$0xf]
        %v303 = vld [vmem:[%s227 + $0x1c] sm:$0xf]
        %v304 = vld [vmem:[%s227 + $0x20] sm:$0xf]
        %v305 = vld [vmem:[%s227 + $0x24] sm:$0xf]
        %v306 = vld [vmem:[%s227 + $0x28] sm:$0xf]
        %v307 = vld [vmem:[%s227 + $0x2c] sm:$0xf]
        %v308 = vld [vmem:[%s227 + $0x30] sm:$0xf]
        %v309 = vld [vmem:[%s227 + $0x34] sm:$0xf]
        %v310 = vld [vmem:[%s227 + $0x38] sm:$0xf]
        %v311 = vld [vmem:[%s227 + $0x3c] sm:$0xf]
        %v312 = vld [vmem:[%s273] sm:$0x1]
        %v313 = vunpack.c.l.bf16 %v312
        %v314 = vlaneseq
        %v315 = vshrl.u32 %v314, 7
        %v316 = vsub.s32 0, %v315
        %v317 = vrot.slane %v313, %v316
        %v334 = vunpack.c.l.b16 %v296
        %v335 = vunpack.c.l.b16 %v297
        %v336 = vunpack.c.l.b16 %v298
        %v337 = vunpack.c.l.b16 %v299
        %v338 = vunpack.c.l.b16 %v300
        %v339 = vunpack.c.l.b16 %v301
        %v340 = vunpack.c.l.b16 %v302
        %v341 = vunpack.c.l.b16 %v303
        %v342 = vunpack.c.l.b16 %v304
        %v343 = vunpack.c.l.b16 %v305
        %v344 = vunpack.c.l.b16 %v306
        %v345 = vunpack.c.l.b16 %v307
        %v346 = vunpack.c.l.b16 %v308
        %v347 = vunpack.c.l.b16 %v309
        %v348 = vunpack.c.l.b16 %v310
        %v349 = vunpack.c.l.b16 %v311
        %v350 = vpack.c.b16 %v335, %v334
        %v351 = vpack.c.b16 %v337, %v336
        %v352 = vpack.c.b16 %v339, %v338
        %v353 = vpack.c.b16 %v341, %v340
        %v354 = vpack.c.b16 %v343, %v342
        %v355 = vpack.c.b16 %v345, %v344
        %v356 = vpack.c.b16 %v347, %v346
        %v357 = vpack.c.b16 %v349, %v348
        %366 = vmatprep.subr.bf16.mxu0 0
        %367 = vmatpush1.bf16.msra.mxu0 %v350
        %368 = vmatprep.subr.bf16.mxu0 0
        %369 = vmatpush1.bf16.msra.mxu0 %v351
        %370 = vmatprep.subr.bf16.mxu0 0
        %371 = vmatpush1.bf16.msra.mxu0 %v352
        %372 = vmatprep.subr.bf16.mxu0 0
        %373 = vmatpush1.bf16.msra.mxu0 %v353
        %374 = vmatprep.subr.bf16.mxu0 0
        %375 = vmatpush1.bf16.msra.mxu0 %v354
        %376 = vmatprep.subr.bf16.mxu0 0
        %377 = vmatpush1.bf16.msra.mxu0 %v355
        %378 = vmatprep.subr.bf16.mxu0 0
        %379 = vmatpush1.bf16.msra.mxu0 %v356
        %380 = vmatprep.subr.bf16.mxu0 0
        %381 = vmatpush1.bf16.msra.mxu0 %v357
        %382 = vmatprep.subr.bf16.mxu0 0
        %383 = vmatpush1.bf16.msra.mxu0 0
        %384 = vmatprep.subr.bf16.mxu0 0
        %385 = vmatpush1.bf16.msra.mxu0 0
        %386 = vmatprep.subr.bf16.mxu0 0
        %387 = vmatpush1.bf16.msra.mxu0 0
        %388 = vmatprep.subr.bf16.mxu0 0
        %389 = vmatpush1.bf16.msra.mxu0 0
        %390 = vmatprep.subr.bf16.mxu0 0
        %391 = vmatpush1.bf16.msra.mxu0 0
        %392 = vmatprep.subr.bf16.mxu0 0
        %393 = vmatpush1.bf16.msra.mxu0 0
        %394 = vmatprep.subr.bf16.mxu0 0
        %395 = vmatpush1.bf16.msra.mxu0 0
        %396 = vmatprep.subr.bf16.mxu0 0
        %397 = vmatpush1.bf16.msra.mxu0 0
        %398 = vmatprep.mubr.bf16.mxu0 0
        %399 = vmatmul.mubr.bf16.gmra.mrb[0].mxu0 %v295
        %v400 = vpop.f32.mrb[0].mxu0
        %v401 = vadd.f32 %v317, %v400
        %v402 = vpop.f32.mrb[0].mxu0
        %v403 = vpop.f32.mrb[0].mxu0
        %v404 = vadd.f32 %v317, %v403
        %v405 = vpop.f32.mrb[0].mxu0
        %406 = vdwg.mxu0
        %v407 = vmax.f32 %v401, 0.0
        %v408 = vmax.f32 %v404, 0.0
        %p409 = scmp.lt.s32.totalorder %s27, 5
        // Predicated region
        $region41: #{fwd.1} parent=31 // pred_check
          %p410 = pneg %p409
        $region42: #{fwd.1} parent=31 // pred_check_branch
          %412 = sbr.rel (%p410) target = $region44
        $region43: #{fwd.1} parent=31 // pred_region
          %v413 = vpack.c.bf16 %v408, %v407
          %414 = vst [vmem:[#allocation2] sm:$0xff] %v413
        $region44: #{fwd.1} parent=31 // pred_fallthru
          _
        %v415 = vpack.c.bf16 %v408, %v407
        %v417 = vunpack.c.l.b16 %v415
        %v418 = vunpack.c.h.b16 %v415
        %v419 = vpack.c.b16 %v417, %v417
        %v420 = vpack.c.b16 %v418, %v418
        %423 = vst [vmem:[%s264] sm:$0xf] %v419
        %424 = vst [vmem:[%s264 + $0x4] sm:$0xf] %v420
        %p425 = scmp.eq.s32.totalorder %s27, 5
        // Predicated region
        $region45: #{fwd.1} parent=31 // pred_check
          %p426 = pneg %p425
        $region46: #{fwd.1} parent=31 // pred_check_branch
          %428 = sbr.rel (%p426) target = $region48
        $region47: #{fwd.1} parent=31 // pred_region
          %429 = vst [vmem:[%s278] sm:$0xff] %v401
          %430 = vst [vmem:[%s278 + $0x8] sm:$0xff] %v404
        $region48: #{fwd.1} parent=31 // pred_fallthru
          _
        %s431 = smul.u32 2, %s26
        %p432 = scmp.lt.s32.totalorder %s431, 1
        %s433 = scalar_select %p432, %s431, 1
        %s434 = smul.addr %s433, 8
        %s435 = scalar_lea.vmem %s3, %s434
        %s436 = sand.u32 %s148, 1
        %s437 = scalar_lea.sflag [#allocation5], %s436
        %s438 = sand.u32 %s148, 1
        %s439 = smul.addr %s438, 8
        %s440 = scalar_lea.vmem [#allocation6], %s439
        // Predicated region
        $region49: #{fwd.1} parent=31 // pred_check
          %p441 = pneg %p130
        $region50: #{fwd.1} parent=31 // pred_check_branch
          %443 = sbr.rel (%p441) target = $region52
        $region51: #{fwd.1} parent=31 // pred_region
          %s444 = smul.u32 2, %s26
        $region52: #{fwd.1} parent=31 // pred_fallthru
          _
        // Predicated region
        $region53: #{fwd.1} parent=31 // pred_check
          %p445 = pneg %p158
        $region54: #{fwd.1} parent=31 // pred_check_branch
          %447 = sbr.rel (%p445) target = $region56
        $region55: #{fwd.1} parent=31 // pred_region
          %s448 = smul.u32 2, %s26
          %s450 = ssub.s32 128, 128
          %451 = vsyncadd %s437, %s450
          %s452 = smul.addr %s27, 2
          %s453 = sadd.s32 %s448, %s452
          %s454 = smul.addr %s453, 64
          %s455 = scalar_lea.hbm %s4, %s454
          %s456 = sshll.u32 %s440, 4
          %s457 = int_to_ptr.vmem [resolvable:$true] %s456
          %462 = dma.vmem_to_hbm [thread:$0]  %s457, 128, %s455, %s437, 64, 64, 4
        $region56: #{fwd.1} parent=31 // pred_fallthru
          _
        // Predicated region
        $region57: #{fwd.1} parent=31 // pred_check
          %p463 = pneg %p130
        $region58: #{fwd.1} parent=31 // pred_check_branch
          %465 = sbr.rel (%p463) target = $region60
        $region59: #{fwd.1} parent=31 // pred_region
          %s466 = smul.u32 2, %s26
          %p467 = scmp.lt.s32.totalorder %s466, 1
          %s468 = scalar_select %p467, %s466, 1
          %s469 = smul.addr %s468, 8
          %s470 = scalar_lea.vmem %s3, %s469
        $region60: #{fwd.1} parent=31 // pred_fallthru
          _
      $region32: #{fwd.1} parent=5 // pred_fallthru
        _
      %p471 = scmp.le.s32.totalorder 2, %s17
      // Predicated region
      $region61: #{fwd.1} parent=5 // pred_check
        %p472 = pneg %p471
      $region62: #{fwd.1} parent=5 // pred_check_branch
        %474 = sbr.rel (%p472) target = $region64
      $region63: #{fwd.1} parent=5 // pred_region
        %s475 = ssub.s32 %s17, 2
        // Predicated region
        $region65: #{fwd.1} parent=63 // pred_check
          %p476 = pneg %p164
        $region66: #{fwd.1} parent=63 // pred_check_branch
          %478 = sbr.rel (%p476) target = $region68
        $region67: #{fwd.1} parent=63 // pred_region
          %s479 = sand.u32 %s149, 1
          %s480 = scalar_lea.sflag [#allocation5], %s479
          %s481 = sand.u32 %s149, 1
          %s482 = smul.addr %s481, 8
          %s483 = scalar_lea.vmem [#allocation6], %s482
          %484 = dma.done %s480, 128
        $region68: #{fwd.1} parent=63 // pred_fallthru
          _
      $region64: #{fwd.1} parent=5 // pred_fallthru
        _
    $region6: #{fwd.1} parent=1 // loop_footer
      %s21 = sadd.s32 1, %s17
    $region7: #{fwd.1} parent=1 // loop_footer_branch
      %16 = sbr.rel target = $region3
    $region8: #{fwd.1} parent=1 // loop_exit
      _
    %485 = vsyncpa [#allocation4], 1
    %s486 = scalar_lea.sflag [#allocation4], 1
    %487 = vsyncpa %s486, 1
    %488 = vsyncpa [#allocation5], 1
    %s489 = scalar_lea.sflag [#allocation5], 1
    %490 = vsyncpa %s489, 1

</llo_original>
